<compile_context>
chip_gen: v5e
topology: v5e:2x2
jax: 0.10.0
libtpu: 0.0.40
codegen_flags: <defaults>
</compile_context>

<pallas_src>
import functools

import jax
import jax.numpy as jnp
import numpy as np
from jax.experimental import pallas as pl
from jax.experimental.pallas import tpu as pltpu


# ----------------------------- pltpu.roll direction probe -----------------------------
def _roll_probe_kernel(x_ref, o_ref):
    o_ref[...] = pltpu.roll(x_ref[...], shift=1, axis=0)


def probe_roll_sign():
    """+1 if pltpu.roll matches jnp.roll semantics along the sublane axis, else -1."""
    x = np.arange(64 * 128, dtype=np.float32).reshape(64, 128)
    out = pl.pallas_call(
        _roll_probe_kernel,
        out_shape=jax.ShapeDtypeStruct((64, 128), jnp.float32),
    )(jnp.asarray(x))
    out = np.asarray(jax.device_get(out))
    if np.array_equal(out, np.roll(x, 1, axis=0)):
        return 1
    if np.array_equal(out, np.roll(x, -1, axis=0)):
        return -1
    return 1  # should be unreachable


# ----------------------------- fused conv stack (one pallas_call) -----------------------------
_PW32 = 40   # padded frame width for the 32-wide layers (multiple of 8, >= 32 + 2)
_PW16 = 24   # padded frame width for the 16-wide layers (multiple of 8, >= 16 + 2)


def _zero_border(s, b, *, H, W):
    """Zero only the border strips of frame b (rows 0 / H+1 and padded cols [W, Wpad))."""
    Hp2, Wpad, C = s.shape[1], s.shape[2], s.shape[3]
    zrow = jnp.zeros((Wpad, C), jnp.bfloat16)
    s[b, 0, :, :] = zrow
    s[b, H + 1, :, :] = zrow
    s[b, :, W:, :] = jnp.zeros((Hp2, Wpad - W, C), jnp.bfloat16)


def _conv3x3_relu(frame, b, w_ref, b_ref, *, H, Wpad, roll_sign):
    """3x3 conv (padding=1) + bias + ReLU with the dx taps folded into the MXU K dim.

    frame: (B, H+2, Wpad, Cin) bf16 scratch; rows [1,H+1) x cols [0,W) hold data, border is 0
           (the trailing zero columns double as the wrap-around pad for the rolled bands).
    w_ref: (3, 3*Cin, Cout) bf16 with K ordered (dx, ci).   b_ref: (1, Cout) f32.
    Returns (H, Wpad, Cout) f32; only cols [0, W) are valid.
    """
    Cin = frame.shape[3]
    Cout = w_ref.shape[2]
    M = H * Wpad
    acc = jnp.zeros((M, Cout), jnp.float32)
    for dy in range(3):
        # One cheap leading-dim slice + reshape per dy band (Wpad % 8 == 0 -> no relayout).
        band = frame[b, dy:dy + H, :, :].reshape(M, Cin)            # bf16
        left = pltpu.roll(band, shift=roll_sign % M, axis=0)        # x[.., w-1] tap (dx=0)
        right = pltpu.roll(band, shift=(-roll_sign) % M, axis=0)    # x[.., w+1] tap (dx=2)
        kop = jnp.concatenate([left, band, right], axis=-1)         # (M, 3*Cin)
        acc = acc + jnp.dot(kop, w_ref[dy], preferred_element_type=jnp.float32)
    out = jnp.maximum(acc + b_ref[...], 0.0)
    return out.reshape(H, Wpad, Cout)


def _maxpool2x2(x):
    """2x2 / stride-2 max pool of an (H, W, C) value (H, W even)."""
    H, W, C = x.shape
    xh = x.reshape(H // 2, 2, W, C)
    xh = jnp.maximum(xh[:, 0], xh[:, 1])
    xw = xh.reshape(H // 2, W // 2, 2, C)
    return jnp.maximum(xw[:, :, 0, :], xw[:, :, 1, :])


def conv_stack_kernel(x_ref, w1_ref, b1_ref, w2_ref, b2_ref, w3_ref, b3_ref,
                      w4_ref, b4_ref, o_ref, s1, s2, s3, s4, *, roll_sign, block_b):
    # x_ref: (B, 32, 32, 3) f32 NHWC images;  o_ref: (B, 64, 128) bf16 pooled features.
    # s1: (B, 34, 40, 3)  s2: (B, 34, 40, 32)  s3/s4: (B, 18, 24, 64)   bf16 zero-framed frames.
    for b in range(block_b):
        # Re-zero only the border strips each step (interiors are fully overwritten below).
        # Never gate this on program_id: under megacore each core owns its own scratch copy.
        _zero_border(s1, b, H=32, W=32)
        _zero_border(s2, b, H=32, W=32)
        _zero_border(s3, b, H=16, W=16)
        _zero_border(s4, b, H=16, W=16)

        # conv1 + ReLU (K-folded: 3 matmuls of K=9) straight from the NHWC image.
        s1[b, 1:33, 0:32, :] = x_ref[b].astype(jnp.bfloat16)
        a1 = _conv3x3_relu(s1, b, w1_ref, b1_ref, H=32, Wpad=_PW32, roll_sign=roll_sign)
        s2[b, 1:33, 0:32, :] = a1[:, 0:32, :].astype(jnp.bfloat16)

        # conv2 + ReLU + maxpool1 fused (K=96; the (32,32,64) activation never leaves VMEM).
        a2 = _conv3x3_relu(s2, b, w2_ref, b2_ref, H=32, Wpad=_PW32, roll_sign=roll_sign)
        s3[b, 1:17, 0:16, :] = _maxpool2x2(a2[:, 0:32, :]).astype(jnp.bfloat16)

        # TODO(synk): dropout1/2/3 of the PyTorch module are identity here (inference semantics).

        # conv3 + ReLU (K=192).
        a3 = _conv3x3_relu(s3, b, w3_ref, b3_ref, H=16, Wpad=_PW16, roll_sign=roll_sign)
        s4[b, 1:17, 0:16, :] = a3[:, 0:16, :].astype(jnp.bfloat16)

        # conv4 + ReLU + maxpool2 + (h, w, c) flatten -> lane-dense (64, 128) output tile.
        a4 = _conv3x3_relu(s4, b, w4_ref, b4_ref, H=16, Wpad=_PW16, roll_sign=roll_sign)
        p4 = _maxpool2x2(a4[:, 0:16, :])
        o_ref[b] = p4.reshape(64, 128).astype(o_ref.dtype)


def conv_stack(x_nhwc, params, *, roll_sign, block_b):
    """x_nhwc: (N, 32, 32, 3) f32 -> (N, 64, 128) bf16 pooled features ((h, w, c) flattened)."""
    N = x_nhwc.shape[0]
    assert N % block_b == 0
    B = block_b
    kernel = functools.partial(conv_stack_kernel, roll_sign=roll_sign, block_b=block_b)
    return pl.pallas_call(
        kernel,
        out_shape=jax.ShapeDtypeStruct((N, 64, 128), jnp.bfloat16),
        grid_spec=pltpu.PrefetchScalarGridSpec(
            num_scalar_prefetch=0,
            grid=(N // B,),    # B images per step amortize per-step overhead; extent kept >= 2
            in_specs=[
                pl.BlockSpec((B, 32, 32, 3), lambda n: (n, 0, 0, 0)),
                pl.BlockSpec((3, 9, 32), lambda n: (0, 0, 0)),
                pl.BlockSpec((1, 32), lambda n: (0, 0)),
                pl.BlockSpec((3, 96, 64), lambda n: (0, 0, 0)),
                pl.BlockSpec((1, 64), lambda n: (0, 0)),
                pl.BlockSpec((3, 192, 64), lambda n: (0, 0, 0)),
                pl.BlockSpec((1, 64), lambda n: (0, 0)),
                pl.BlockSpec((3, 192, 128), lambda n: (0, 0, 0)),
                pl.BlockSpec((1, 128), lambda n: (0, 0)),
            ],
            out_specs=pl.BlockSpec((B, 64, 128), lambda n: (n, 0, 0)),
            scratch_shapes=[
                pltpu.VMEM((B, 34, _PW32, 3), jnp.bfloat16),
                pltpu.VMEM((B, 34, _PW32, 32), jnp.bfloat16),
                pltpu.VMEM((B, 18, _PW16, 64), jnp.bfloat16),
                pltpu.VMEM((B, 18, _PW16, 64), jnp.bfloat16),
            ],
        ),
        compiler_params=pltpu.CompilerParams(dimension_semantics=("parallel",)),
    )(x_nhwc, params["conv1_w"], params["conv1_b"],
      params["conv2_w"], params["conv2_b"],
      params["conv3_w"], params["conv3_b"],
      params["conv4_w"], params["conv4_b"])


# ----------------------------- fused fc1 + ReLU + fc2 head -----------------------------
def head_kernel(x_ref, w1_ref, b1_ref, w2_ref, b2_ref, o_ref, acc_ref):
    k = pl.program_id(0)

    @pl.when(k == 0)
    def _():
        acc_ref[...] = jnp.zeros_like(acc_ref)

    acc_ref[...] += jnp.dot(x_ref[...], w1_ref[...], preferred_element_type=jnp.float32)

    @pl.when(k == pl.num_programs(0) - 1)
    def _():
        h = jnp.maximum(acc_ref[...] + b1_ref[...], 0.0)                 # fc1 + ReLU (f32)
        logits = jnp.dot(h.astype(jnp.bfloat16), w2_ref[...],
                         preferred_element_type=jnp.float32)             # fc2 (padded to 128)
        o_ref[...] = (logits + b2_ref[...]).astype(o_ref.dtype)


def head(feats, w1, b1, w2, b2, *, tk=4096):
    """feats: (M, 8192) bf16 -> logits (M, 128) f32 (cols >= 10 are zero padding)."""
    M, K = feats.shape
    HID = w1.shape[1]          # 512
    NP = w2.shape[1]           # 128
    assert K % tk == 0
    return pl.pallas_call(
        head_kernel,
        out_shape=jax.ShapeDtypeStruct((M, NP), jnp.float32),
        grid_spec=pltpu.PrefetchScalarGridSpec(
            num_scalar_prefetch=0,
            grid=(K // tk,),                      # 2 steps: big K tile, weight-stream bound
            in_specs=[
                pl.BlockSpec((M, tk), lambda k: (0, k)),
                pl.BlockSpec((tk, HID), lambda k: (k, 0)),
                pl.BlockSpec((1, HID), lambda k: (0, 0)),
                pl.BlockSpec((HID, NP), lambda k: (0, 0)),   # fc2 weight resident (128 KB)
                pl.BlockSpec((1, NP), lambda k: (0, 0)),
            ],
            out_specs=pl.BlockSpec((M, NP), lambda k: (0, 0)),
            scratch_shapes=[pltpu.VMEM((M, HID), jnp.float32)],
        ),
        compiler_params=pltpu.CompilerParams(dimension_semantics=("arbitrary",)),
    )(feats, w1, b1, w2, b2)


# ----------------------------- parameters -----------------------------
def init_torch_params(key):
    """Synthetic parameters in the PyTorch module's native layouts."""
    ks = jax.random.split(key, 12)

    def w(k, shape, scale=0.05):
        return (scale * jax.random.normal(k, shape)).astype(jnp.float32)

    return {
        "conv1_w": w(ks[0], (32, 3, 3, 3)),      # OIHW, like nn.Conv2d.weight
        "conv1_b": w(ks[1], (32,)),
        "conv2_w": w(ks[2], (64, 32, 3, 3)),
        "conv2_b": w(ks[3], (64,)),
        "conv3_w": w(ks[4], (64, 64, 3, 3)),
        "conv3_b": w(ks[5], (64,)),
        "conv4_w": w(ks[6], (128, 64, 3, 3)),
        "conv4_b": w(ks[7], (128,)),
        "fc1_w": w(ks[8], (512, 128 * 8 * 8)),   # (out, in) with in flattened as (c, h, w)
        "fc1_b": w(ks[9], (512,)),
        "fc2_w": w(ks[10], (10, 512)),
        "fc2_b": w(ks[11], (10,)),
    }


def prepare_params(p):
    """One-time layout / dtype conversion from PyTorch layouts to kernel layouts."""
    def conv_w(w_oihw):
        # OIHW -> HWIO -> (dy, dx*Cin, Cout): the kernel's per-dy K-folded layout.
        hwio = jnp.transpose(w_oihw, (2, 3, 1, 0))
        kh, kw, ci, co = hwio.shape
        return hwio.reshape(kh, kw * ci, co).astype(jnp.bfloat16)

    out = {}
    for i, c in (("1", 32), ("2", 64), ("3", 64), ("4", 128)):
        out[f"conv{i}_w"] = conv_w(p[f"conv{i}_w"])
        out[f"conv{i}_b"] = p[f"conv{i}_b"].reshape(1, c)
    # fc1: permute input rows from PyTorch's (c, h, w) flatten order to the kernel's (h, w, c)
    # order (so no activation transpose is needed), transpose to (in, out), cast to bf16.
    w_fc1 = p["fc1_w"].reshape(512, 128, 8, 8)
    w_fc1 = jnp.transpose(w_fc1, (2, 3, 1, 0)).reshape(8 * 8 * 128, 512)
    out["fc1_w"] = w_fc1.astype(jnp.bfloat16)
    out["fc1_b"] = p["fc1_b"].reshape(1, 512)
    # fc2: (10, 512) -> (512, 128) zero-padded so the head's output tile is lane-dense.
    w_fc2 = jnp.pad(jnp.transpose(p["fc2_w"], (1, 0)), ((0, 0), (0, 118)))
    out["fc2_w"] = w_fc2.astype(jnp.bfloat16)
    out["fc2_b"] = jnp.pad(p["fc2_b"], (0, 118)).reshape(1, 128)
    return out


# ----------------------------- forward pass -----------------------------
def _pick_block_b(n):
    """Largest images-per-step block that divides n while keeping >= 2 parallel grid steps."""
    for b in (8, 4, 2, 1):
        if n % b == 0 and n // b >= 2:
            return b
    return 1


def forward(params, x_nchw, *, roll_sign=1):
    # x_nchw: (N, 3, 32, 32) float32, same contract as the PyTorch module.
    N = x_nchw.shape[0]
    block_b = _pick_block_b(N)
    x = jnp.transpose(x_nchw, (0, 2, 3, 1)).astype(jnp.float32)          # NHWC

    feats = conv_stack(x, params, roll_sign=roll_sign, block_b=block_b)  # (N, 64, 128) bf16
    feats = feats.reshape(N, 64 * 128)                                   # (h, w, c) flattened

    logits = head(feats, params["fc1_w"], params["fc1_b"],
                  params["fc2_w"], params["fc2_b"], tk=4096)             # (N, 128) f32
    return logits[:, :10]


if __name__ == "__main__":
    key = jax.random.PRNGKey(0)
    pkey, xkey = jax.random.split(key)
    params = prepare_params(init_torch_params(pkey))
    x = jax.random.normal(xkey, (4, 3, 32, 32), dtype=jnp.float32)

    sign = probe_roll_sign()
    fwd = jax.jit(functools.partial(forward, roll_sign=sign))
    out = jax.block_until_ready(fwd(params, x))
    assert out.shape == (4, 10) and out.dtype == jnp.float32
    print("KERNEL_OK")
</pallas_src>

<mosaic_0001>
module attributes {stable_mosaic.version = 11 : i64} {
  func.func @_roll_probe_kernel(%arg0: memref<64x128xf32, #tpu.memory_space<vmem>>, %arg1: memref<64x128xf32, #tpu.memory_space<vmem>>) attributes {dimension_semantics = [], scalar_prefetch = 0 : i64, scratch_operands = 0 : i64, tpu.core_type = #tpu.core_type<tc>} {
    %c0 = arith.constant 0 : index
    %c0_0 = arith.constant 0 : index
    %0 = vector.load %arg0[%c0, %c0_0] : memref<64x128xf32, #tpu.memory_space<vmem>>, vector<64x128xf32>
    %c1_i32 = arith.constant 1 : i32
    %1 = tpu.dynamic_rotate %0 by %c1_i32 dim 0 : vector<64x128xf32>, i32 -> vector<64x128xf32>
    %c0_1 = arith.constant 0 : index
    %c0_2 = arith.constant 0 : index
    %2 = vector.load %arg1[%c0_1, %c0_2] : memref<64x128xf32, #tpu.memory_space<vmem>>, vector<64x128xf32>
    tpu.vector_store %arg1[%c0_1, %c0_2], %1 {strides = array<i32>} : memref<64x128xf32, #tpu.memory_space<vmem>>, vector<64x128xf32>,
    return
  }
}

</mosaic_0001>

<llo_original>
// kernel: tpu_custom_call.1
$region0: #{tpu_custom_call.1}
  #allocation0 [shape = 'u32[]', space=smem, size = 0x4, offset = 0x4, fixed_abs, tag = 'smem constant byte address 0x4 - core index']
  #allocation1 [shape = 'u32[72,128]{1,0:T(1,128)}', space=vmem, size = 0x9000, scoped, tag = 'internal scratch']
  %s0 = inlined_call_operand.hbm [shape: f32[64,128], index: 0, kind: input, shape index: {}]
  %s1 = inlined_call_operand.hbm [shape: f32[64,128], index: 1, kind: output, shape index: {}]
  %s2 = sld [smem:[#allocation0]]
  $region18: #{tpu_custom_call.1} parent=0
    _
  %s4 = ssub.s32 1, %s2
  %s5 = scalar_select 0, %s4, %s2
  $region1: #{tpu_custom_call.1} parent=0
    #allocation2 [shape = 'u8[32768]{0}', space=vmem, size = 0x8000, scoped, tag = 'input window, operand 0, single buffered']
    #allocation3 [shape = 's32[1]{0}', space=sflag, size = 0x4, scoped, tag = 'scoped memory for tpu_custom_call.1']
    #allocation4 [shape = 's32[1]{0}', space=sflag, size = 0x4, scoped, tag = 'scoped memory for tpu_custom_call.1']
    #allocation5 [shape = 'u8[32768]{0}', space=vmem, size = 0x8000, scoped, tag = 'output window, operand 0, single buffered']
    %6 = vsyncpa [#allocation3], 0
    %7 = vsyncpa [#allocation4], 0
    // Predicated region
    $region2: #{tpu_custom_call.1} parent=1 // pred_check
      _
    $region3: #{tpu_custom_call.1} parent=1 // pred_check_branch
      %9 = sbr.rel (0) target = $region5
    $region4: #{tpu_custom_call.1} parent=1 // pred_region
      %11 = vsyncadd [#allocation3], 0
      %s12 = sshll.u32 %s0, 4
      %s13 = int_to_ptr.hbm [resolvable:$true] %s12
      %s14 = sshll.u32 [#allocation2], 4
      %s15 = int_to_ptr.vmem [resolvable:$true] %s14
      %20 = dma.hbm_to_vmem [thread:$0]  %s13, 1024, %s15, [#allocation3], 128, 128, 8
    $region5: #{tpu_custom_call.1} parent=1 // pred_fallthru
      _
    // Predicated region
    $region6: #{tpu_custom_call.1} parent=1 // pred_check
      _
    $region7: #{tpu_custom_call.1} parent=1 // pred_check_branch
      %22 = sbr.rel (0) target = $region9
    $region8: #{tpu_custom_call.1} parent=1 // pred_region
      %24 = dma.done [#allocation3], 1024
    $region9: #{tpu_custom_call.1} parent=1 // pred_fallthru
      _
    %v25 = vld [vmem:[#allocation2] sm:$0xff]
    %v26 = vld [vmem:[#allocation2 + $0x8] sm:$0xff]
    %v27 = vld [vmem:[#allocation2 + $0x10] sm:$0xff]
    %v28 = vld [vmem:[#allocation2 + $0x18] sm:$0xff]
    %v29 = vld [vmem:[#allocation2 + $0x20] sm:$0xff]
    %v30 = vld [vmem:[#allocation2 + $0x28] sm:$0xff]
    %v31 = vld [vmem:[#allocation2 + $0x30] sm:$0xff]
    %v32 = vld [vmem:[#allocation2 + $0x38] sm:$0xff]
    %v33 = vrot.slane %v25, 7
    %v34 = vrot.slane %v26, 7
    %v35 = vrot.slane %v27, 7
    %v36 = vrot.slane %v28, 7
    %v37 = vrot.slane %v29, 7
    %v38 = vrot.slane %v30, 7
    %v39 = vrot.slane %v31, 7
    %v40 = vrot.slane %v32, 7
    %v41 = vlaneseq
    %v42 = vshrl.u32 %v41, 7
    %vm43 = vcmp.lt.s32.totalorder %v42, 1
    %v44 = vsel %vm43, %v39, %v40
    %v45 = vsel %vm43, %v38, %v39
    %v46 = vsel %vm43, %v37, %v38
    %v47 = vsel %vm43, %v36, %v37
    %v48 = vsel %vm43, %v35, %v36
    %v49 = vsel %vm43, %v34, %v35
    %v50 = vsel %vm43, %v33, %v34
    %v51 = vsel %vm43, %v40, %v33
    %52 = vst [vmem:[#allocation5] sm:$0xff] %v51
    %53 = vst [vmem:[#allocation5 + $0x8] sm:$0xff] %v50
    %54 = vst [vmem:[#allocation5 + $0x10] sm:$0xff] %v49
    %55 = vst [vmem:[#allocation5 + $0x18] sm:$0xff] %v48
    %56 = vst [vmem:[#allocation5 + $0x20] sm:$0xff] %v47
    %57 = vst [vmem:[#allocation5 + $0x28] sm:$0xff] %v46
    %58 = vst [vmem:[#allocation5 + $0x30] sm:$0xff] %v45
    %59 = vst [vmem:[#allocation5 + $0x38] sm:$0xff] %v44
    // Predicated region
    $region10: #{tpu_custom_call.1} parent=1 // pred_check
      _
    $region11: #{tpu_custom_call.1} parent=1 // pred_check_branch
      %61 = sbr.rel (0) target = $region13
    $region12: #{tpu_custom_call.1} parent=1 // pred_region
      %63 = vsyncadd [#allocation4], 0
      %s64 = sshll.u32 [#allocation5], 4
      %s65 = int_to_ptr.vmem [resolvable:$true] %s64
      %s66 = sshll.u32 %s1, 4
      %s67 = int_to_ptr.hbm [resolvable:$true] %s66
      %72 = dma.vmem_to_hbm [thread:$0]  %s65, 1024, %s67, [#allocation4], 128, 128, 8
    $region13: #{tpu_custom_call.1} parent=1 // pred_fallthru
      _
    // Predicated region
    $region14: #{tpu_custom_call.1} parent=1 // pred_check
      _
    $region15: #{tpu_custom_call.1} parent=1 // pred_check_branch
      %74 = sbr.rel (0) target = $region17
    $region16: #{tpu_custom_call.1} parent=1 // pred_region
      %76 = dma.done [#allocation4], 1024
    $region17: #{tpu_custom_call.1} parent=1 // pred_fallthru
      _
    %77 = vsyncpa [#allocation3], 1
    %78 = vsyncpa [#allocation4], 1

</llo_original>
